<compile_context>
chip_gen: v7x
topology: tpu7x:2x2x1
jax: 0.10.0
libtpu: 0.0.40
codegen_flags: <defaults>
</compile_context>

<pallas_src>
import functools

import jax
import jax.numpy as jnp
from jax import lax
from jax.experimental import pallas as pl
from jax.experimental.pallas import tpu as pltpu


# VMEM budget used to size the recurrent kernel's tiles.  Kept <= ~36 MiB so the
# same tiling closes on v7x (64 MiB physical per TC) as well as v5e/v6e (128 MiB).
_VMEM_BUDGET_BYTES = 36 * 1024 * 1024
_VMEM_LIMIT_BYTES = 48 * 1024 * 1024


# ------------------------------- helpers ----------------------------------- #

def _round_up(x, m):
    return ((x + m - 1) // m) * m


def _largest_divisor(n, cap, multiple=1):
    """Largest d <= cap with d % multiple == 0 and n % d == 0 (fallback: multiple)."""
    best = multiple
    d = multiple
    lim = min(n, cap)
    while d <= lim:
        if n % d == 0:
            best = d
        d += multiple
    return best


def _choose_blocks(S, B_pad, H_pad):
    """Pick (T_BLOCK, B_BLOCK) from a VMEM budget."""
    G = 4 * H_pad
    # Batch block: <=256 (fills 256-wide MXU on v6e/v7x); force >=2 blocks when
    # B_pad >= 16 so both v7x TensorCores get work on the parallel batch axis.
    b_cap = 256
    if B_pad >= 16:
        b_cap = min(b_cap, B_pad // 2)
    b_block = _largest_divisor(B_pad, b_cap, multiple=8)

    def vmem_estimate(tb):
        gx = 2 * tb * b_block * G * 4            # double-buffered f32 gx tile
        out = 2 * tb * b_block * H_pad * 4       # double-buffered f32 out tile
        whh = H_pad * G * 2                      # bf16 weight, single resident copy
        state = 10 * b_block * H_pad * 4         # h0/c0/hN/cN blocks + scratch
        return gx + out + whh + state

    t_cap = 1
    for cand in (64, 32, 16, 8, 4, 2, 1):
        if vmem_estimate(cand) <= _VMEM_BUDGET_BYTES:
            t_cap = cand
            break

    if S <= t_cap:
        return S, b_block
    # Prefer a divisor of S in [t_cap//2, t_cap] to avoid the masked tail block.
    t_block = t_cap
    for d in range(t_cap, max(t_cap // 2, 1) - 1, -1):
        if S % d == 0:
            t_block = d
            break
    return t_block, b_block


# -------------------- kernel 1: time-parallel input projection -------------- #

def _proj_kernel(x_ref, w_ref, b_ref, o_ref):
    # (R_BLOCK, E) @ (E, 4H_pad) on the MXU with bf16 operands, f32 accumulation,
    # bias folded in.  Output stores are lane-dense (G multiple of 128).
    o_ref[...] = (jnp.dot(x_ref[...].astype(jnp.bfloat16), w_ref[...],
                          preferred_element_type=jnp.float32)
                  + b_ref[...])


def _input_projection(x_flat, w_t_bf16, bias_f32):
    """x_flat: (M, E) f32; w_t_bf16: (E, 4H_pad) bf16; bias: (1, 4H_pad) f32."""
    M, E = x_flat.shape
    G = w_t_bf16.shape[1]
    r_block = _largest_divisor(M, 512, multiple=8)
    n_rb = M // r_block

    return pl.pallas_call(
        _proj_kernel,
        out_shape=jax.ShapeDtypeStruct((M, G), jnp.float32),
        grid_spec=pltpu.PrefetchScalarGridSpec(
            num_scalar_prefetch=0,
            grid=(n_rb,),
            in_specs=[
                pl.BlockSpec((r_block, E), lambda i: (i, 0)),
                # Constant operands: fully VMEM-resident, no per-step double-buffer.
                pl.BlockSpec(memory_space=pltpu.MemorySpace.VMEM),
                pl.BlockSpec(memory_space=pltpu.MemorySpace.VMEM),
            ],
            out_specs=pl.BlockSpec((r_block, G), lambda i: (i, 0)),
        ),
        compiler_params=pltpu.CompilerParams(
            dimension_semantics=("parallel",),
            vmem_limit_bytes=_VMEM_LIMIT_BYTES),
    )(x_flat, w_t_bf16, bias_f32)


# -------------------- kernel 2: time-blocked LSTM recurrence ---------------- #

def _lstm_scan_kernel(gx_ref, whh_ref, h0_ref, c0_ref,
                      out_ref, hN_ref, cN_ref, h_scr, c_scr,
                      *, hidden, t_block, seq_len, need_mask):
    tb = pl.program_id(1)           # time-block index (innermost, "arbitrary")

    @pl.when(tb == 0)
    def _():
        h_scr[...] = h0_ref[...]
        c_scr[...] = c0_ref[...]

    H = hidden

    def step(t, carry):
        h_prev, c_prev = carry
        # Only the recurrent matmul is on the serial path (x-projection + bias were
        # precomputed into gx).  The weight ref is read inside the dot so the MXU
        # streams from the resident VMEM copy (no 64-vreg live value / spills).
        gates = gx_ref[t] + jnp.dot(h_prev.astype(jnp.bfloat16), whh_ref[...],
                                    preferred_element_type=jnp.float32)
        # Gate packing is (i, f, o, g): one sigmoid over the first 3*H lanes,
        # one tanh over the last H lanes.
        sig = jax.nn.sigmoid(gates[:, :3 * H])
        i_g = sig[:, 0 * H:1 * H]
        f_g = sig[:, 1 * H:2 * H]
        o_g = sig[:, 2 * H:3 * H]
        g_g = jnp.tanh(gates[:, 3 * H:])
        c_new = f_g * c_prev + i_g * g_g
        h_new = o_g * jnp.tanh(c_new)
        if need_mask:
            valid = (tb * t_block + t) < seq_len
            h_new = jnp.where(valid, h_new, h_prev)
            c_new = jnp.where(valid, c_new, c_prev)
        out_ref[t] = h_new          # lane-dense store (H_pad multiple of 128)
        return (h_new, c_new)

    # Full unroll for small H; partial unroll at large H to bound vreg pressure.
    unroll = True if (H <= 256 or t_block <= 4) else 4
    h_fin, c_fin = lax.fori_loop(0, t_block, step,
                                 (h_scr[...], c_scr[...]), unroll=unroll)
    h_scr[...] = h_fin
    c_scr[...] = c_fin

    @pl.when(tb == pl.num_programs(1) - 1)
    def _():
        hN_ref[...] = h_fin
        cN_ref[...] = c_fin


def lstm_layer_pallas(x_sbe_padded, w_ih, w_hh, b_ih, b_hh, h0, c0):
    """One LSTM layer on batch-padded, time-major input.

    x_sbe_padded: (S, B_pad, E_x) f32, B_pad % 8 == 0; feature lanes beyond the
        true width must be zero (guaranteed by previous layer / caller padding).
    w_ih: (4H, E_w) with E_w <= E_x; w_hh: (4H, H); biases (4H,).
    h0, c0: (B, H) unpadded initial state.
    Returns: out (S, B_pad, H_pad), h_n (B_pad, H_pad), c_n (B_pad, H_pad).
    """
    S, B_pad, E_x = x_sbe_padded.shape
    H = w_hh.shape[1]
    E_w = w_ih.shape[1]
    H_pad = _round_up(H, 128)
    G = 4 * H_pad

    # --- per-gate padding; reorder torch gates (i, f, g, o) -> (i, f, o, g) --- #
    perm = jnp.array([0, 1, 3, 2])

    def pack_weight(w, in_dim, in_pad):
        w4 = w.astype(jnp.float32).reshape(4, H, in_dim)[perm]
        w4 = jnp.pad(w4, ((0, 0), (0, H_pad - H), (0, in_pad - in_dim)))
        return w4.reshape(4 * H_pad, in_pad)

    wih_t = pack_weight(w_ih, E_w, E_x).T.astype(jnp.bfloat16)      # (E_x, G)
    whh_t = pack_weight(w_hh, H, H_pad).T.astype(jnp.bfloat16)      # (H_pad, G)
    bias = (b_ih + b_hh).astype(jnp.float32).reshape(4, H)[perm]
    bias = jnp.pad(bias, ((0, 0), (0, H_pad - H))).reshape(1, G)

    B = h0.shape[0]
    h0_p = jnp.pad(h0.astype(jnp.float32), ((0, B_pad - B), (0, H_pad - H)))
    c0_p = jnp.pad(c0.astype(jnp.float32), ((0, B_pad - B), (0, H_pad - H)))

    # --- 1) hoisted input projection (one big MXU matmul, bias folded) ------- #
    gx = _input_projection(x_sbe_padded.reshape(S * B_pad, E_x), wih_t, bias)
    gx = gx.reshape(S, B_pad, G)

    # --- 2) recurrent scan ---------------------------------------------------- #
    T_BLOCK, B_BLOCK = _choose_blocks(S, B_pad, H_pad)
    S_pad = _round_up(S, T_BLOCK)
    need_mask = S_pad != S
    if need_mask:
        gx = jnp.pad(gx, ((0, S_pad - S), (0, 0), (0, 0)))
    n_tb = S_pad // T_BLOCK
    n_bb = B_pad // B_BLOCK

    kernel = functools.partial(_lstm_scan_kernel, hidden=H_pad, t_block=T_BLOCK,
                               seq_len=S, need_mask=need_mask)

    out_p, hN_p, cN_p = pl.pallas_call(
        kernel,
        out_shape=(jax.ShapeDtypeStruct((S_pad, B_pad, H_pad), jnp.float32),
                   jax.ShapeDtypeStruct((B_pad, H_pad), jnp.float32),
                   jax.ShapeDtypeStruct((B_pad, H_pad), jnp.float32)),
        grid_spec=pltpu.PrefetchScalarGridSpec(
            num_scalar_prefetch=0,
            # NOTE: time MUST stay the innermost ("arbitrary") grid axis — the
            # h/c scratch carry relies on sequential time blocks per batch block.
            grid=(n_bb, n_tb),
            in_specs=[
                pl.BlockSpec((T_BLOCK, B_BLOCK, G), lambda b, t: (t, b, 0)),    # gx
                pl.BlockSpec(memory_space=pltpu.MemorySpace.VMEM),              # W_hh^T
                pl.BlockSpec((B_BLOCK, H_pad), lambda b, t: (b, 0)),            # h0
                pl.BlockSpec((B_BLOCK, H_pad), lambda b, t: (b, 0)),            # c0
            ],
            out_specs=(
                pl.BlockSpec((T_BLOCK, B_BLOCK, H_pad), lambda b, t: (t, b, 0)),
                pl.BlockSpec((B_BLOCK, H_pad), lambda b, t: (b, 0)),            # h_n
                pl.BlockSpec((B_BLOCK, H_pad), lambda b, t: (b, 0)),            # c_n
            ),
            scratch_shapes=[pltpu.VMEM((B_BLOCK, H_pad), jnp.float32),
                            pltpu.VMEM((B_BLOCK, H_pad), jnp.float32)]),
        compiler_params=pltpu.CompilerParams(
            dimension_semantics=("parallel", "arbitrary"),
            vmem_limit_bytes=_VMEM_LIMIT_BYTES),
    )(gx, whh_t, h0_p, c0_p)

    if need_mask:
        out_p = out_p[:S]
    return out_p, hN_p, cN_p


# ----------------------------- Encoder module ------------------------------- #

class EncoderPallas:
    """JAX/Pallas port of the PyTorch Pointer-Net Encoder (rnn=True)."""

    def __init__(self, embedding_dim, hidden_dim, n_layers, dropout,
                 bidir=False, key=None):
        # TODO(synk): bidirectional LSTM variant not implemented (bidir=False only).
        assert not bidir, "bidir=True not supported in this Pallas port"
        # TODO(synk): inter-layer dropout (training mode) not applied; eval semantics.
        self.hidden_dim = hidden_dim
        self.n_layers = n_layers
        self.dropout = dropout

        key = jax.random.PRNGKey(42) if key is None else key
        k = 1.0 / jnp.sqrt(jnp.float32(self.hidden_dim))
        self.params = []
        in_dim = embedding_dim
        for _ in range(n_layers):
            key, k1, k2, k3, k4 = jax.random.split(key, 5)
            w_ih = jax.random.uniform(k1, (4 * self.hidden_dim, in_dim),
                                      jnp.float32, -k, k)
            w_hh = jax.random.uniform(k2, (4 * self.hidden_dim, self.hidden_dim),
                                      jnp.float32, -k, k)
            b_ih = jax.random.uniform(k3, (4 * self.hidden_dim,),
                                      jnp.float32, -k, k)
            b_hh = jax.random.uniform(k4, (4 * self.hidden_dim,),
                                      jnp.float32, -k, k)
            self.params.append((w_ih, w_hh, b_ih, b_hh))
            in_dim = self.hidden_dim

    def init_hidden(self, embedded_inputs):
        batch_size = embedded_inputs.shape[0]
        h0 = jnp.zeros((self.n_layers, batch_size, self.hidden_dim), jnp.float32)
        c0 = jnp.zeros((self.n_layers, batch_size, self.hidden_dim), jnp.float32)
        return (h0, c0)

    def forward(self, embedded_inputs, hidden):
        # embedded_inputs: (B, S, E)  ->  time-major (S, B, E), pad batch ONCE;
        # activations stay padded (B_pad, H_pad) between layers, sliced at the end.
        B, S, _ = embedded_inputs.shape
        H = self.hidden_dim
        B_pad = _round_up(B, 8)
        x = jnp.transpose(embedded_inputs, (1, 0, 2)).astype(jnp.float32)
        x = jnp.pad(x, ((0, 0), (0, B_pad - B), (0, 0)))

        h0_all, c0_all = hidden
        h_finals, c_finals = [], []
        for l, (w_ih, w_hh, b_ih, b_hh) in enumerate(self.params):
            x, hN, cN = lstm_layer_pallas(x, w_ih, w_hh, b_ih, b_hh,
                                          h0_all[l], c0_all[l])
            h_finals.append(hN[:B, :H])
            c_finals.append(cN[:B, :H])
        outputs = jnp.transpose(x[:, :B, :H], (1, 0, 2))   # (B, S, H)
        return outputs, (jnp.stack(h_finals, 0), jnp.stack(c_finals, 0))


# ------------------------------ pure-JAX ref -------------------------------- #

def _lstm_layer_ref(x_sbe, w_ih, w_hh, b_ih, b_hh, h0, c0):
    H = w_hh.shape[1]

    def step(carry, x_t):
        h, c = carry
        gates = x_t @ w_ih.T + b_ih + h @ w_hh.T + b_hh
        i = jax.nn.sigmoid(gates[:, :H])
        f = jax.nn.sigmoid(gates[:, H:2 * H])
        g = jnp.tanh(gates[:, 2 * H:3 * H])
        o = jax.nn.sigmoid(gates[:, 3 * H:])
        c = f * c + i * g
        h = o * jnp.tanh(c)
        return (h, c), h

    (hN, cN), out = lax.scan(step, (h0, c0), x_sbe)
    return out, hN, cN


def _encoder_ref(enc, embedded_inputs, hidden):
    x = jnp.transpose(embedded_inputs, (1, 0, 2)).astype(jnp.float32)
    h0_all, c0_all = hidden
    hs, cs = [], []
    for l, (w_ih, w_hh, b_ih, b_hh) in enumerate(enc.params):
        x, hN, cN = _lstm_layer_ref(x, w_ih, w_hh, b_ih, b_hh,
                                    h0_all[l], c0_all[l])
        hs.append(hN)
        cs.append(cN)
    return jnp.transpose(x, (1, 0, 2)), (jnp.stack(hs, 0), jnp.stack(cs, 0))


# ---------------------------------- main ------------------------------------ #

if __name__ == "__main__":
    batch, seq, embedding_dim, hidden_dim, n_layers = 2, 8, 32, 32, 2

    key = jax.random.PRNGKey(0)
    embedded_inputs = jax.random.normal(
        key, (batch, seq, embedding_dim), jnp.float32)

    enc = EncoderPallas(embedding_dim, hidden_dim, n_layers,
                        dropout=0.0, bidir=False)

    hidden0 = enc.init_hidden(embedded_inputs)
    outputs, (h_n, c_n) = enc.forward(embedded_inputs, hidden0)
    jax.block_until_ready((outputs, h_n, c_n))

    # correctness check against a pure-JAX f32 LSTM reference
    # (tolerance relaxed vs f32 parity because MXU operands are bf16).
    ref_out, (ref_h, ref_c) = _encoder_ref(enc, embedded_inputs, hidden0)
    assert outputs.shape == (batch, seq, hidden_dim)
    assert h_n.shape == (n_layers, batch, hidden_dim)
    assert c_n.shape == (n_layers, batch, hidden_dim)
    assert jnp.allclose(outputs, ref_out, atol=2e-2, rtol=2e-2)
    assert jnp.allclose(h_n, ref_h, atol=2e-2, rtol=2e-2)
    assert jnp.allclose(c_n, ref_c, atol=2e-2, rtol=2e-2)

    print("KERNEL_OK")
</pallas_src>

<mosaic_0001>
module attributes {stable_mosaic.version = 11 : i64} {
  func.func @_proj_kernel(%arg0: i32, %arg1: memref<64x32xf32, #tpu.memory_space<vmem>>, %arg2: memref<32x512xbf16, #tpu.memory_space<vmem>>, %arg3: memref<1x512xf32, #tpu.memory_space<vmem>>, %arg4: memref<64x512xf32, #tpu.memory_space<vmem>>) attributes {dimension_semantics = [#tpu.dimension_semantics<parallel>], iteration_bounds = array<i64: 1>, scalar_prefetch = 0 : i64, scratch_operands = 0 : i64, tpu.core_type = #tpu.core_type<tc>, window_params = [{transform_indices = @transform_0, window_bounds = array<i64: 64, 32>}, {pipeline_mode = #tpu.pipeline_mode<synchronous>, transform_indices = @transform_1, window_bounds = array<i64: 32, 512>}, {pipeline_mode = #tpu.pipeline_mode<synchronous>, transform_indices = @transform_2, window_bounds = array<i64: 1, 512>}, {transform_indices = @transform_3, window_bounds = array<i64: 64, 512>}]} {
    %c0 = arith.constant 0 : index
    %c0_0 = arith.constant 0 : index
    %0 = vector.load %arg1[%c0, %c0_0] : memref<64x32xf32, #tpu.memory_space<vmem>>, vector<64x32xf32>
    %1 = arith.truncf %0 : vector<64x32xf32> to vector<64x32xbf16>
    %c0_1 = arith.constant 0 : index
    %c0_2 = arith.constant 0 : index
    %2 = vector.load %arg2[%c0_1, %c0_2] : memref<32x512xbf16, #tpu.memory_space<vmem>>, vector<32x512xbf16>
    %cst = arith.constant dense<0.000000e+00> : vector<64x512xf32>
    %3 = tpu.matmul %1, %2, %cst {dimension_numbers = #tpu.dot_dimension_numbers<[1], [0], [0], [1], [0, 0, 1, 1], [], []>} : vector<64x32xbf16>, vector<32x512xbf16>, vector<64x512xf32> -> vector<64x512xf32>
    %c0_3 = arith.constant 0 : index
    %c0_4 = arith.constant 0 : index
    %4 = vector.load %arg3[%c0_3, %c0_4] : memref<1x512xf32, #tpu.memory_space<vmem>>, vector<1x512xf32>
    %5 = vector.broadcast %4 : vector<1x512xf32> to vector<64x512xf32>
    %6 = arith.addf %3, %5 : vector<64x512xf32>
    %c0_5 = arith.constant 0 : index
    %c0_6 = arith.constant 0 : index
    %7 = vector.load %arg4[%c0_5, %c0_6] : memref<64x512xf32, #tpu.memory_space<vmem>>, vector<64x512xf32>
    tpu.vector_store %arg4[%c0_5, %c0_6], %6 {strides = array<i32>} : memref<64x512xf32, #tpu.memory_space<vmem>>, vector<64x512xf32>,
    return
  }
  func.func @transform_0(%arg0: i32) -> (i32, i32) {
    %c0_i32 = arith.constant 0 : i32
    %c0_i32_0 = arith.constant 0 : i32
    return %arg0, %c0_i32 : i32, i32
  }
  func.func @transform_1(%arg0: i32) -> (i32, i32) {
    %c0_i32 = arith.constant 0 : i32
    %c0_i32_0 = arith.constant 0 : i32
    %c0_i32_1 = arith.constant 0 : i32
    return %c0_i32, %c0_i32_0 : i32, i32
  }
  func.func @transform_2(%arg0: i32) -> (i32, i32) {
    %c0_i32 = arith.constant 0 : i32
    %c0_i32_0 = arith.constant 0 : i32
    %c0_i32_1 = arith.constant 0 : i32
    return %c0_i32, %c0_i32_0 : i32, i32
  }
  func.func @transform_3(%arg0: i32) -> (i32, i32) {
    %c0_i32 = arith.constant 0 : i32
    %c0_i32_0 = arith.constant 0 : i32
    return %arg0, %c0_i32 : i32, i32
  }
}

</mosaic_0001>

<llo_original>
// kernel: tpu_custom_call.1
$region0: #{tpu_custom_call.1}
  #allocation0 [shape = 'u32[]', space=smem, size = 0x4, offset = 0x4, fixed_abs, tag = 'smem constant byte address 0x4 - core index']
  #allocation1 [shape = 'u32[144,128]{1,0:T(1,128)}', space=vmem, size = 0x12000, scoped, tag = 'internal scratch']
  %s0 = inlined_call_operand.vmem [shape: f32[64,32], index: 0, kind: input, shape index: {}]
  %s1 = inlined_call_operand.vmem [shape: bf16[32,512], index: 1, kind: input, shape index: {}]
  %s2 = inlined_call_operand.vmem [shape: f32[1,512], index: 2, kind: input, shape index: {}]
  %s3 = inlined_call_operand.hbm [shape: f32[64,512], index: 3, kind: output, shape index: {}]
  %s4 = sld [smem:[#allocation0]]
  $region22: #{tpu_custom_call.1} parent=0
    _
  %s6 = ssub.s32 1, %s4
  %s7 = scalar_select 0, %s6, %s4
  $region1: #{tpu_custom_call.1} parent=0
    #allocation2 [shape = 'u8[131072]{0}', space=vmem, size = 0x20000, scoped, tag = 'output window, operand 0, single buffered']
    #allocation3 [shape = 's32[1]{0}', space=sflag, size = 0x4, scoped, tag = 'scoped memory for tpu_custom_call.1']
    %8 = vsyncpa [#allocation3], 0
    // Predicated region
    $region2: #{tpu_custom_call.1} parent=1 // pred_check
      _
    $region3: #{tpu_custom_call.1} parent=1 // pred_check_branch
      %10 = sbr.rel (0) target = $region5
    $region4: #{tpu_custom_call.1} parent=1 // pred_region
      _
    $region5: #{tpu_custom_call.1} parent=1 // pred_fallthru
      _
    // Predicated region
    $region6: #{tpu_custom_call.1} parent=1 // pred_check
      _
    $region7: #{tpu_custom_call.1} parent=1 // pred_check_branch
      %12 = sbr.rel (0) target = $region9
    $region8: #{tpu_custom_call.1} parent=1 // pred_region
      _
    $region9: #{tpu_custom_call.1} parent=1 // pred_fallthru
      _
    // Predicated region
    $region10: #{tpu_custom_call.1} parent=1 // pred_check
      _
    $region11: #{tpu_custom_call.1} parent=1 // pred_check_branch
      %14 = sbr.rel (0) target = $region13
    $region12: #{tpu_custom_call.1} parent=1 // pred_region
      _
    $region13: #{tpu_custom_call.1} parent=1 // pred_fallthru
      _
    %v16 = vld [vmem:[%s0] sm:$0xff]
    %v17 = vld [vmem:[%s0 + $0x8] sm:$0xff]
    %v18 = vld [vmem:[%s0 + $0x10] sm:$0xff]
    %v19 = vld [vmem:[%s0 + $0x18] sm:$0xff]
    %v20 = vld [vmem:[%s0 + $0x20] sm:$0xff]
    %v21 = vld [vmem:[%s0 + $0x28] sm:$0xff]
    %v22 = vld [vmem:[%s0 + $0x30] sm:$0xff]
    %v23 = vld [vmem:[%s0 + $0x38] sm:$0xff]
    %v24 = vpack.c.bf16 %v17, %v16
    %v25 = vpack.c.bf16 %v19, %v18
    %v26 = vpack.c.bf16 %v21, %v20
    %v27 = vpack.c.bf16 %v23, %v22
    %v28 = vld [vmem:[%s1] sm:$0xff]
    %v29 = vld [vmem:[%s1 + $0x8] sm:$0xff]
    %v30 = vld [vmem:[%s1 + $0x10] sm:$0xff]
    %v31 = vld [vmem:[%s1 + $0x18] sm:$0xff]
    %v32 = vld [vmem:[%s1 + $0x20] sm:$0xff]
    %v33 = vld [vmem:[%s1 + $0x28] sm:$0xff]
    %v34 = vld [vmem:[%s1 + $0x30] sm:$0xff]
    %v35 = vld [vmem:[%s1 + $0x38] sm:$0xff]
    %v36 = vld [vmem:[%s2] sm:$0xf]
    %v38 = vlaneseq
    %v39 = vshrl.u32 %v38, 7
    %v40 = vsub.s32 0, %v39
    %v41 = vrot.slane %v36, %v40
    %v42 = vlaneseq
    %v43 = vshrl.u32 %v42, 7
    %v44 = vsub.s32 1, %v43
    %v45 = vrot.slane %v36, %v44
    %v46 = vlaneseq
    %v47 = vshrl.u32 %v46, 7
    %v48 = vsub.s32 2, %v47
    %v49 = vrot.slane %v36, %v48
    %v50 = vlaneseq
    %v51 = vshrl.u32 %v50, 7
    %v52 = vsub.s32 3, %v51
    %v53 = vrot.slane %v36, %v52
    %v66 = vunpack.c.l.b16 %v28
    %v67 = vunpack.c.h.b16 %v28
    %v68 = vunpack.c.l.b16 %v29
    %v69 = vunpack.c.h.b16 %v29
    %v70 = vunpack.c.l.b16 %v30
    %v71 = vunpack.c.h.b16 %v30
    %v72 = vunpack.c.l.b16 %v31
    %v73 = vunpack.c.h.b16 %v31
    %v74 = vunpack.c.l.b16 %v32
    %v75 = vunpack.c.h.b16 %v32
    %v76 = vunpack.c.l.b16 %v33
    %v77 = vunpack.c.h.b16 %v33
    %v78 = vunpack.c.l.b16 %v34
    %v79 = vunpack.c.h.b16 %v34
    %v80 = vunpack.c.l.b16 %v35
    %v81 = vunpack.c.h.b16 %v35
    %v82 = vpack.c.b16 %v70, %v66
    %v83 = vpack.c.b16 %v71, %v67
    %v84 = vpack.c.b16 %v72, %v68
    %v85 = vpack.c.b16 %v73, %v69
    %v86 = vpack.c.b16 %v78, %v74
    %v87 = vpack.c.b16 %v79, %v75
    %v88 = vpack.c.b16 %v80, %v76
    %v89 = vpack.c.b16 %v81, %v77
    %vm98 = vcmask 261120
    %v100 = vsel %vm98, %v24, 0
    %v103 = vsel %vm98, %v25, 0
    %v106 = vsel %vm98, %v26, 0
    %v109 = vsel %vm98, %v27, 0
    %111 = vmatprep.subr.bf16.mxu0 %v83
    %112 = vmatpush1.bf16.msra.mxu0 %v82
    %113 = vmatprep.subr.bf16.mxu0 %v87
    %114 = vmatpush1.bf16.msra.mxu0 %v86
    %115 = vmatprep.subr.bf16.mxu0 0
    %116 = vmatpush1.bf16.msra.mxu0 0
    %117 = vmatprep.subr.bf16.mxu0 0
    %118 = vmatpush1.bf16.msra.mxu0 0
    %119 = vmatprep.subr.bf16.mxu0 0
    %120 = vmatpush1.bf16.msra.mxu0 0
    %121 = vmatprep.subr.bf16.mxu0 0
    %122 = vmatpush1.bf16.msra.mxu0 0
    %123 = vmatprep.subr.bf16.mxu0 0
    %124 = vmatpush1.bf16.msra.mxu0 0
    %125 = vmatprep.subr.bf16.mxu0 0
    %126 = vmatpush1.bf16.msra.mxu0 0
    %127 = vmatprep.subr.bf16.mxu0 0
    %128 = vmatpush1.bf16.msra.mxu0 0
    %129 = vmatprep.subr.bf16.mxu0 0
    %130 = vmatpush1.bf16.msra.mxu0 0
    %131 = vmatprep.subr.bf16.mxu0 0
    %132 = vmatpush1.bf16.msra.mxu0 0
    %133 = vmatprep.subr.bf16.mxu0 0
    %134 = vmatpush1.bf16.msra.mxu0 0
    %135 = vmatprep.subr.bf16.mxu0 0
    %136 = vmatpush1.bf16.msra.mxu0 0
    %137 = vmatprep.subr.bf16.mxu0 0
    %138 = vmatpush1.bf16.msra.mxu0 0
    %139 = vmatprep.subr.bf16.mxu0 0
    %140 = vmatpush1.bf16.msra.mxu0 0
    %141 = vmatprep.subr.bf16.mxu0 0
    %142 = vmatpush1.bf16.msra.mxu0 0
    %143 = vmatprep.mubr.bf16.mxu0 0
    %144 = vmatmul.mubr.bf16.gmra.mrb[0].mxu0 %v100
    %v145 = vpop.f32.mrb[0].mxu0
    %v146 = vadd.f32 %v41, %v145
    %v147 = vpop.f32.mrb[0].mxu0
    %v148 = vadd.f32 %v45, %v147
    %v149 = vpop.f32.mrb[0].mxu0
    %v150 = vadd.f32 %v41, %v149
    %v151 = vpop.f32.mrb[0].mxu0
    %v152 = vadd.f32 %v45, %v151
    %153 = vmatprep.mubr.bf16.mxu0 0
    %154 = vmatmul.mubr.bf16.gmra.mrb[0].mxu0 %v103
    %v155 = vpop.f32.mrb[0].mxu0
    %v156 = vadd.f32 %v41, %v155
    %v157 = vpop.f32.mrb[0].mxu0
    %v158 = vadd.f32 %v45, %v157
    %v159 = vpop.f32.mrb[0].mxu0
    %v160 = vadd.f32 %v41, %v159
    %v161 = vpop.f32.mrb[0].mxu0
    %v162 = vadd.f32 %v45, %v161
    %163 = vmatprep.mubr.bf16.mxu0 0
    %164 = vmatmul.mubr.bf16.gmra.mrb[0].mxu0 %v106
    %v165 = vpop.f32.mrb[0].mxu0
    %v166 = vadd.f32 %v41, %v165
    %v167 = vpop.f32.mrb[0].mxu0
    %v168 = vadd.f32 %v45, %v167
    %v169 = vpop.f32.mrb[0].mxu0
    %v170 = vadd.f32 %v41, %v169
    %v171 = vpop.f32.mrb[0].mxu0
    %v172 = vadd.f32 %v45, %v171
    %173 = vmatprep.mubr.bf16.mxu0 0
    %174 = vmatmul.mubr.bf16.gmra.mrb[0].mxu0 %v109
    %v175 = vpop.f32.mrb[0].mxu0
    %v176 = vadd.f32 %v41, %v175
    %v177 = vpop.f32.mrb[0].mxu0
    %v178 = vadd.f32 %v45, %v177
    %v179 = vpop.f32.mrb[0].mxu0
    %v180 = vadd.f32 %v41, %v179
    %v181 = vpop.f32.mrb[0].mxu0
    %v182 = vadd.f32 %v45, %v181
    %183 = vdwg.mxu0
    %184 = vmatprep.subr.bf16.mxu0 %v85
    %185 = vmatpush1.bf16.msra.mxu0 %v84
    %186 = vmatprep.subr.bf16.mxu0 %v89
    %187 = vmatpush1.bf16.msra.mxu0 %v88
    %188 = vmatprep.subr.bf16.mxu0 0
    %189 = vmatpush1.bf16.msra.mxu0 0
    %190 = vmatprep.subr.bf16.mxu0 0
    %191 = vmatpush1.bf16.msra.mxu0 0
    %192 = vmatprep.subr.bf16.mxu0 0
    %193 = vmatpush1.bf16.msra.mxu0 0
    %194 = vmatprep.subr.bf16.mxu0 0
    %195 = vmatpush1.bf16.msra.mxu0 0
    %196 = vmatprep.subr.bf16.mxu0 0
    %197 = vmatpush1.bf16.msra.mxu0 0
    %198 = vmatprep.subr.bf16.mxu0 0
    %199 = vmatpush1.bf16.msra.mxu0 0
    %200 = vmatprep.subr.bf16.mxu0 0
    %201 = vmatpush1.bf16.msra.mxu0 0
    %202 = vmatprep.subr.bf16.mxu0 0
    %203 = vmatpush1.bf16.msra.mxu0 0
    %204 = vmatprep.subr.bf16.mxu0 0
    %205 = vmatpush1.bf16.msra.mxu0 0
    %206 = vmatprep.subr.bf16.mxu0 0
    %207 = vmatpush1.bf16.msra.mxu0 0
    %208 = vmatprep.subr.bf16.mxu0 0
    %209 = vmatpush1.bf16.msra.mxu0 0
    %210 = vmatprep.subr.bf16.mxu0 0
    %211 = vmatpush1.bf16.msra.mxu0 0
    %212 = vmatprep.subr.bf16.mxu0 0
    %213 = vmatpush1.bf16.msra.mxu0 0
    %214 = vmatprep.subr.bf16.mxu0 0
    %215 = vmatpush1.bf16.msra.mxu0 0
    %216 = vmatprep.mubr.bf16.mxu0 0
    %217 = vmatmul.mubr.bf16.gmra.mrb[0].mxu0 %v100
    %v218 = vpop.f32.mrb[0].mxu0
    %v219 = vadd.f32 %v49, %v218
    %v220 = vpop.f32.mrb[0].mxu0
    %v221 = vadd.f32 %v53, %v220
    %v222 = vpop.f32.mrb[0].mxu0
    %v223 = vadd.f32 %v49, %v222
    %v224 = vpop.f32.mrb[0].mxu0
    %v225 = vadd.f32 %v53, %v224
    %226 = vmatprep.mubr.bf16.mxu0 0
    %227 = vmatmul.mubr.bf16.gmra.mrb[0].mxu0 %v103
    %v228 = vpop.f32.mrb[0].mxu0
    %v229 = vadd.f32 %v49, %v228
    %v230 = vpop.f32.mrb[0].mxu0
    %v231 = vadd.f32 %v53, %v230
    %v232 = vpop.f32.mrb[0].mxu0
    %v233 = vadd.f32 %v49, %v232
    %v234 = vpop.f32.mrb[0].mxu0
    %v235 = vadd.f32 %v53, %v234
    %236 = vmatprep.mubr.bf16.mxu0 0
    %237 = vmatmul.mubr.bf16.gmra.mrb[0].mxu0 %v106
    %v238 = vpop.f32.mrb[0].mxu0
    %v239 = vadd.f32 %v49, %v238
    %v240 = vpop.f32.mrb[0].mxu0
    %v241 = vadd.f32 %v53, %v240
    %v242 = vpop.f32.mrb[0].mxu0
    %v243 = vadd.f32 %v49, %v242
    %v244 = vpop.f32.mrb[0].mxu0
    %v245 = vadd.f32 %v53, %v244
    %246 = vmatprep.mubr.bf16.mxu0 0
    %247 = vmatmul.mubr.bf16.gmra.mrb[0].mxu0 %v109
    %v248 = vpop.f32.mrb[0].mxu0
    %v249 = vadd.f32 %v49, %v248
    %v250 = vpop.f32.mrb[0].mxu0
    %v251 = vadd.f32 %v53, %v250
    %v252 = vpop.f32.mrb[0].mxu0
    %v253 = vadd.f32 %v49, %v252
    %v254 = vpop.f32.mrb[0].mxu0
    %v255 = vadd.f32 %v53, %v254
    %256 = vdwg.mxu0
    %257 = vst [vmem:[#allocation2] sm:$0xff] %v146
    %258 = vst [vmem:[#allocation2 + $0x8] sm:$0xff] %v148
    %259 = vst [vmem:[#allocation2 + $0x10] sm:$0xff] %v219
    %260 = vst [vmem:[#allocation2 + $0x18] sm:$0xff] %v221
    %261 = vst [vmem:[#allocation2 + $0x20] sm:$0xff] %v150
    %262 = vst [vmem:[#allocation2 + $0x28] sm:$0xff] %v152
    %263 = vst [vmem:[#allocation2 + $0x30] sm:$0xff] %v223
    %264 = vst [vmem:[#allocation2 + $0x38] sm:$0xff] %v225
    %265 = vst [vmem:[#allocation2 + $0x40] sm:$0xff] %v156
    %266 = vst [vmem:[#allocation2 + $0x48] sm:$0xff] %v158
    %267 = vst [vmem:[#allocation2 + $0x50] sm:$0xff] %v229
    %268 = vst [vmem:[#allocation2 + $0x58] sm:$0xff] %v231
    %269 = vst [vmem:[#allocation2 + $0x60] sm:$0xff] %v160
    %270 = vst [vmem:[#allocation2 + $0x68] sm:$0xff] %v162
    %271 = vst [vmem:[#allocation2 + $0x70] sm:$0xff] %v233
    %272 = vst [vmem:[#allocation2 + $0x78] sm:$0xff] %v235
    %273 = vst [vmem:[#allocation2 + $0x80] sm:$0xff] %v166
    %274 = vst [vmem:[#allocation2 + $0x88] sm:$0xff] %v168
    %275 = vst [vmem:[#allocation2 + $0x90] sm:$0xff] %v239
    %276 = vst [vmem:[#allocation2 + $0x98] sm:$0xff] %v241
    %277 = vst [vmem:[#allocation2 + $0xa0] sm:$0xff] %v170
    %278 = vst [vmem:[#allocation2 + $0xa8] sm:$0xff] %v172
    %279 = vst [vmem:[#allocation2 + $0xb0] sm:$0xff] %v243
    %280 = vst [vmem:[#allocation2 + $0xb8] sm:$0xff] %v245
    %281 = vst [vmem:[#allocation2 + $0xc0] sm:$0xff] %v176
    %282 = vst [vmem:[#allocation2 + $0xc8] sm:$0xff] %v178
    %283 = vst [vmem:[#allocation2 + $0xd0] sm:$0xff] %v249
    %284 = vst [vmem:[#allocation2 + $0xd8] sm:$0xff] %v251
    %285 = vst [vmem:[#allocation2 + $0xe0] sm:$0xff] %v180
    %286 = vst [vmem:[#allocation2 + $0xe8] sm:$0xff] %v182
    %287 = vst [vmem:[#allocation2 + $0xf0] sm:$0xff] %v253
    %288 = vst [vmem:[#allocation2 + $0xf8] sm:$0xff] %v255
    // Predicated region
    $region14: #{tpu_custom_call.1} parent=1 // pred_check
      _
    $region15: #{tpu_custom_call.1} parent=1 // pred_check_branch
      %290 = sbr.rel (0) target = $region17
    $region16: #{tpu_custom_call.1} parent=1 // pred_region
      %s292 = ssub.s32 4096, 4096
      %293 = vsyncadd [#allocation3], %s292
      %s294 = sshll.u32 [#allocation2], 4
      %s295 = int_to_ptr.vmem [resolvable:$true] %s294
      %300 = dma.vmem_to_hbm [thread:$0]  %s295, 4096, %s3, [#allocation3], 512, 512, 32
    $region17: #{tpu_custom_call.1} parent=1 // pred_fallthru
      _
    // Predicated region
    $region18: #{tpu_custom_call.1} parent=1 // pred_check
      _
    $region19: #{tpu_custom_call.1} parent=1 // pred_check_branch
      %302 = sbr.rel (0) target = $region21
    $region20: #{tpu_custom_call.1} parent=1 // pred_region
      %303 = dma.done [#allocation3], 4096
    $region21: #{tpu_custom_call.1} parent=1 // pred_fallthru
      _
    %304 = vsyncpa [#allocation3], 1

</llo_original>
